<compile_context>
chip_gen: v6e
topology: v6e:2x2x1
jax: 0.10.0
libtpu: 0.0.40
codegen_flags: <defaults>
</compile_context>

<pallas_src>
import functools

import jax
import jax.numpy as jnp
from jax import lax
from jax.experimental import pallas as pl
from jax.experimental.pallas import tpu as pltpu  # noqa: F401  (TPU backend)


def _round_up(x, m):
    return (x + m - 1) // m * m


# -----------------------------------------------------------------------------
# Fused kernel: observational samples y  AND  conditional max rewards m,
# computed over one concatenated context slab, written as one lane-dense row.
# -----------------------------------------------------------------------------
def _fused_kernel(c_ref, w_ref, w2_ref, noise_ref, out_ref, *,
                  num_treatments, inter_row, h_row, hidden_dim, context_dim,
                  batch_obs):
    A = num_treatments
    C = context_dim
    H = hidden_dim
    w2w = w2_ref.shape[1]                      # round_up(H + 2, 8)

    # Fused weight slab rows: [theta_cᵀ | pad | Thetaᵀ | pad | w1ᵀ | ones-row | pad]
    # plus a trailing bias column (b1 on the w1 rows, 1 on the ones-row).
    w_mat = w_ref[:, :C]                       # (R, C)
    bias = w_ref[:, C:C + 1]                   # (R, 1)

    # ---- single MXU pass over the concatenated obs+test context slab
    z = jnp.dot(w_mat, c_ref[...], preferred_element_type=jnp.float32) + bias  # (R, B)

    lin = z[0:1, :]                            # c @ theta_c                (1, B)
    inter = z[inter_row:inter_row + A, :]      # (c @ Theta)ᵀ               (A, B)
    # rows h_row .. h_row+H-1: w1ᵀc + b1 ; row h_row+H: 1 (carries b2) ; rest: 0
    h_aug = jnp.maximum(z[h_row:h_row + w2w, :], 0.0)                        # (w2w, B)

    w2f = w2_ref[...]                          # (A, w2w): [w2ᵀ | b2ᵀ | theta_aᵀ | 0]
    tha_t = w2f[:, H + 1:H + 2]                # theta_aᵀ                   (A, 1)

    # logits = w2ᵀ relu(...) + b2ᵀ  (b2 absorbed by the ones-row; theta_a column
    # multiplies a zero row, contributing nothing)
    logits = jnp.dot(w2f, h_aug, preferred_element_type=jnp.float32)         # (A, B)
    logits = logits - jnp.max(logits, axis=0, keepdims=True)
    p = jnp.exp(logits)
    p = p * pl.reciprocal(jnp.sum(p, axis=0, keepdims=True), approx=True)

    treat = jnp.sum(p * tha_t, axis=0, keepdims=True)        # <p, theta_a>  (1, B)
    inter_eff = jnp.sum(p * inter, axis=0, keepdims=True)    # <p, c@Theta>  (1, B)
    y_all = lin + treat + inter_eff + noise_ref[...]         # noise=0 on test lanes

    rewards = lin + tha_t + inter                            # (A, B)
    m_all = jnp.max(rewards, axis=0, keepdims=True)          # (1, B)

    # One full-tile lane-dense store: obs lanes carry y, test lanes carry m.
    lane = lax.broadcasted_iota(jnp.int32, y_all.shape, dimension=1)
    out_ref[...] = jnp.where(lane < batch_obs, y_all, m_all)


def _full_spec(x):
    """BlockSpec covering the whole (small) array — no grid, single block."""
    return pl.BlockSpec(x.shape, lambda: (0,) * x.ndim)


# -----------------------------------------------------------------------------
# Parameter packing (runs once when 𝛙 / policy are sampled — off the hot path)
# -----------------------------------------------------------------------------
def pack_parameters(params, batch_test):
    w1, b1, w2, b2 = params["w1"], params["b1"], params["w2"], params["b2"]
    theta_c, theta_a, Theta = params["theta_c"], params["theta_a"], params["Theta"]
    noise = params["obs_noise"]                               # (B_obs, 1)

    C, H = w1.shape
    A = w2.shape[1]
    B_obs = noise.shape[0]

    inter_row = 8
    h_row = inter_row + _round_up(A, 8)
    # Review correctness concern: z-slice rows must stay sublane-aligned.
    assert inter_row % 8 == 0 and h_row % 8 == 0, "z slice rows must be 8-aligned"
    w2_width = _round_up(H + 2, 8)
    R = h_row + w2_width                                      # multiple of 8

    # Fused, transposed weight slab with trailing bias column (col C):
    #   row 0            : theta_cᵀ
    #   rows inter_row.. : Thetaᵀ
    #   rows h_row..+H   : w1ᵀ (bias col = b1)
    #   row h_row+H      : zero weights, bias 1  -> z row == 1, carries b2
    W = jnp.zeros((R, C + 1), jnp.float32)
    W = W.at[0, :C].set(theta_c[:, 0])
    W = W.at[inter_row:inter_row + A, :C].set(Theta.T)
    W = W.at[h_row:h_row + H, :C].set(w1.T)
    W = W.at[h_row:h_row + H, C].set(b1[0])
    W = W.at[h_row + H, C].set(1.0)

    # Augmented second layer: [w2ᵀ | b2ᵀ | theta_aᵀ | 0-pad]   (A, w2_width)
    w2_full = jnp.zeros((A, w2_width), jnp.float32)
    w2_full = w2_full.at[:, :H].set(w2.T)
    w2_full = w2_full.at[:, H].set(b2[0])
    w2_full = w2_full.at[:, H + 1].set(theta_a[0])

    # Noise padded to the fused lane width (zeros on the test lanes).
    noise_pad = jnp.zeros((1, B_obs + batch_test), jnp.float32)
    noise_pad = noise_pad.at[:, :B_obs].set(noise.T)

    return dict(W=W, w2_full=w2_full, noise_pad=noise_pad)


# -----------------------------------------------------------------------------
# Forward wrapper (per-call hot path): one concat/transpose + one pallas_call
# -----------------------------------------------------------------------------
@functools.partial(jax.jit, static_argnames=("hidden_dim",))
def bayesian_context_treatment_forward(context_obs, context_test, packed, *,
                                       hidden_dim):
    W, w2_full, noise_pad = packed["W"], packed["w2_full"], packed["noise_pad"]

    B_obs, C = context_obs.shape
    B_test = context_test.shape[0]
    B_total = B_obs + B_test
    A = w2_full.shape[0]
    H = hidden_dim

    inter_row = 8
    h_row = inter_row + _round_up(A, 8)
    assert inter_row % 8 == 0 and h_row % 8 == 0
    assert W.shape == (h_row + _round_up(H + 2, 8), C + 1)
    assert noise_pad.shape == (1, B_total)

    # Lane-dense concatenated context slab (batch on the lane axis), K = C.
    c_all = jnp.concatenate([context_obs, context_test], axis=0).T   # (C, B_total)

    kernel = functools.partial(
        _fused_kernel,
        num_treatments=A, inter_row=inter_row, h_row=h_row,
        hidden_dim=H, context_dim=C, batch_obs=B_obs)

    inputs = (c_all, W, w2_full, noise_pad)
    out = pl.pallas_call(
        kernel,
        out_shape=jax.ShapeDtypeStruct((1, B_total), jnp.float32),
        in_specs=[_full_spec(x) for x in inputs],
        out_specs=pl.BlockSpec((1, B_total), lambda: (0, 0)),
    )(*inputs)
    # TODO(synk): for SBI-scale batches add a 1-D "parallel" grid over the lane
    # axis (128/256-multiple tiles, resident W/w2_full blocks, bf16 contexts).

    # Back to the module's (B, 1) convention.
    return out[:, :B_obs].T, out[:, B_obs:].T


# -----------------------------------------------------------------------------
# Parameter 'sampling' (prior reparameterization) + treatment-policy init
# -----------------------------------------------------------------------------
def init_params(key, context_dim, hidden_dim, num_treatments, batch_obs):
    ks = jax.random.split(key, 8)
    # treatment_policy: Linear(C, H) -> ReLU -> Linear(H, A) -> softmax
    w1 = jax.random.normal(ks[0], (context_dim, hidden_dim), jnp.float32) * 0.2
    b1 = jnp.zeros((1, hidden_dim), jnp.float32)
    w2 = jax.random.normal(ks[1], (hidden_dim, num_treatments), jnp.float32) * 0.2
    b2 = jnp.zeros((1, num_treatments), jnp.float32)
    # Bayesian parameters 𝛙 = (theta_c, theta_a, Theta): mu + sigma * eps
    theta_c = 0.5 + 0.3 * jax.random.normal(ks[2], (context_dim, 1), jnp.float32)
    theta_a = 0.1 + 0.5 * jax.random.normal(ks[3], (1, num_treatments), jnp.float32)
    Theta = 0.2 * jax.random.normal(ks[4], (context_dim, num_treatments), jnp.float32)
    # Deterministic observation-noise sample (Gaussian likelihood).
    # TODO(synk): pyro resamples noise each forward and the SNIS/HMC posterior
    # inference has no Pallas equivalent; only the deterministic sample_joint
    # forward path is implemented (fresh in-kernel noise via pltpu.prng_* is
    # possible but kept out for determinism of this test).
    obs_noise = 0.05 * jax.random.normal(ks[5], (batch_obs, 1), jnp.float32)
    return dict(w1=w1, b1=b1, w2=w2, b2=b2,
                theta_c=theta_c, theta_a=theta_a, Theta=Theta, obs_noise=obs_noise)


def _reference_forward(context_obs, context_test, params):
    """Pure-JAX reference of the same structural equations (sanity check)."""
    w1, b1, w2, b2 = params["w1"], params["b1"], params["w2"], params["b2"]
    theta_c, theta_a, Theta = params["theta_c"], params["theta_a"], params["Theta"]
    noise = params["obs_noise"]
    h = jnp.maximum(context_obs @ w1 + b1, 0.0)
    p = jax.nn.softmax(h @ w2 + b2, axis=-1)
    lin = context_obs @ theta_c
    treat = jnp.sum(p * theta_a, axis=-1, keepdims=True)
    inter_eff = jnp.sum(p * (context_obs @ Theta), axis=-1, keepdims=True)
    y = lin + treat + inter_eff + noise
    rewards = context_test @ theta_c + theta_a + context_test @ Theta
    m = jnp.max(rewards, axis=-1, keepdims=True)
    return y, m


if __name__ == "__main__":
    key = jax.random.PRNGKey(0)
    B_OBS, B_TEST, C, H, A = 8, 8, 16, 32, 8

    k_ctx_obs, k_ctx_test, k_params = jax.random.split(key, 3)
    context_obs = jax.random.normal(k_ctx_obs, (B_OBS, C), jnp.float32)
    context_test = jax.random.normal(k_ctx_test, (B_TEST, C), jnp.float32)
    params = init_params(k_params, C, H, A, B_OBS)
    packed = pack_parameters(params, batch_test=B_TEST)   # off the hot path

    observations, max_rewards = bayesian_context_treatment_forward(
        context_obs, context_test, packed, hidden_dim=H)
    jax.block_until_ready((observations, max_rewards))

    assert observations.shape == (B_OBS, 1)
    assert max_rewards.shape == (B_TEST, 1)

    # Sanity check against a pure-JAX reference of the same forward semantics.
    y_ref, m_ref = _reference_forward(context_obs, context_test, params)
    assert jnp.allclose(observations, y_ref, atol=1e-3, rtol=1e-3)
    assert jnp.allclose(max_rewards, m_ref, atol=1e-3, rtol=1e-3)

    print("KERNEL_OK")
</pallas_src>

<mosaic_0001>
module attributes {stable_mosaic.version = 11 : i64} {
  func.func @_fused_kernel(%arg0: memref<16x16xf32, #tpu.memory_space<vmem>>, %arg1: memref<56x17xf32, #tpu.memory_space<vmem>>, %arg2: memref<8x40xf32, #tpu.memory_space<vmem>>, %arg3: memref<1x16xf32, #tpu.memory_space<vmem>>, %arg4: memref<1x16xf32, #tpu.memory_space<vmem>>) attributes {dimension_semantics = [], scalar_prefetch = 0 : i64, scratch_operands = 0 : i64, tpu.core_type = #tpu.core_type<tc>} {
    %c0 = arith.constant 0 : index
    %c0_0 = arith.constant 0 : index
    %0 = vector.load %arg1[%c0, %c0_0] : memref<56x17xf32, #tpu.memory_space<vmem>>, vector<56x16xf32>
    %c0_1 = arith.constant 0 : index
    %c16 = arith.constant 16 : index
    %1 = vector.load %arg1[%c0_1, %c16] : memref<56x17xf32, #tpu.memory_space<vmem>>, vector<56x1xf32>
    %c0_2 = arith.constant 0 : index
    %c0_3 = arith.constant 0 : index
    %2 = vector.load %arg0[%c0_2, %c0_3] : memref<16x16xf32, #tpu.memory_space<vmem>>, vector<16x16xf32>
    %cst = arith.constant dense<0.000000e+00> : vector<56x16xf32>
    %3 = tpu.matmul %0, %2, %cst {dimension_numbers = #tpu.dot_dimension_numbers<[1], [0], [0], [1], [0, 0, 1, 1], [], []>} : vector<56x16xf32>, vector<16x16xf32>, vector<56x16xf32> -> vector<56x16xf32>
    %4 = vector.broadcast %1 : vector<56x1xf32> to vector<56x16xf32>
    %5 = arith.addf %3, %4 : vector<56x16xf32>
    %6 = vector.extract_strided_slice %5 {offsets = [0, 0], sizes = [1, 16], strides = [1, 1]} : vector<56x16xf32> to vector<1x16xf32>
    %7 = vector.extract_strided_slice %5 {offsets = [8, 0], sizes = [8, 16], strides = [1, 1]} : vector<56x16xf32> to vector<8x16xf32>
    %8 = vector.extract_strided_slice %5 {offsets = [16, 0], sizes = [40, 16], strides = [1, 1]} : vector<56x16xf32> to vector<40x16xf32>
    %cst_4 = arith.constant 0.000000e+00 : f32
    %9 = vector.broadcast %cst_4 : f32 to vector<40x16xf32>
    %10 = arith.maximumf %8, %9 : vector<40x16xf32>
    %c0_5 = arith.constant 0 : index
    %c0_6 = arith.constant 0 : index
    %11 = vector.load %arg2[%c0_5, %c0_6] : memref<8x40xf32, #tpu.memory_space<vmem>>, vector<8x40xf32>
    %12 = vector.extract_strided_slice %11 {offsets = [0, 33], sizes = [8, 1], strides = [1, 1]} : vector<8x40xf32> to vector<8x1xf32>
    %cst_7 = arith.constant dense<0.000000e+00> : vector<8x16xf32>
    %13 = tpu.matmul %11, %10, %cst_7 {dimension_numbers = #tpu.dot_dimension_numbers<[1], [0], [0], [1], [0, 0, 1, 1], [], []>} : vector<8x40xf32>, vector<40x16xf32>, vector<8x16xf32> -> vector<8x16xf32>
    %cst_8 = arith.constant dense<0xFF800000> : vector<16xf32>
    %14 = vector.multi_reduction <maximumf>, %13, %cst_8 [0] : vector<8x16xf32> to vector<16xf32>
    %15 = vector.shape_cast %14 : vector<16xf32> to vector<1x16xf32>
    %16 = vector.broadcast %15 : vector<1x16xf32> to vector<8x16xf32>
    %17 = arith.subf %13, %16 : vector<8x16xf32>
    %18 = math.exp %17 : vector<8x16xf32>
    %cst_9 = arith.constant dense<0.000000e+00> : vector<16xf32>
    %19 = vector.multi_reduction <add>, %18, %cst_9 [0] : vector<8x16xf32> to vector<16xf32>
    %20 = vector.shape_cast %19 : vector<16xf32> to vector<1x16xf32>
    %21 = tpu.reciprocal %20 {approx = true} : vector<1x16xf32> -> vector<1x16xf32>
    %22 = vector.broadcast %21 : vector<1x16xf32> to vector<8x16xf32>
    %23 = arith.mulf %18, %22 : vector<8x16xf32>
    %24 = vector.broadcast %12 : vector<8x1xf32> to vector<8x16xf32>
    %25 = arith.mulf %23, %24 : vector<8x16xf32>
    %cst_10 = arith.constant dense<0.000000e+00> : vector<16xf32>
    %26 = vector.multi_reduction <add>, %25, %cst_10 [0] : vector<8x16xf32> to vector<16xf32>
    %27 = vector.shape_cast %26 : vector<16xf32> to vector<1x16xf32>
    %28 = arith.mulf %23, %7 : vector<8x16xf32>
    %cst_11 = arith.constant dense<0.000000e+00> : vector<16xf32>
    %29 = vector.multi_reduction <add>, %28, %cst_11 [0] : vector<8x16xf32> to vector<16xf32>
    %30 = vector.shape_cast %29 : vector<16xf32> to vector<1x16xf32>
    %31 = arith.addf %6, %27 : vector<1x16xf32>
    %32 = arith.addf %31, %30 : vector<1x16xf32>
    %c0_12 = arith.constant 0 : index
    %c0_13 = arith.constant 0 : index
    %33 = vector.load %arg3[%c0_12, %c0_13] : memref<1x16xf32, #tpu.memory_space<vmem>>, vector<1x16xf32>
    %34 = arith.addf %32, %33 : vector<1x16xf32>
    %35 = vector.broadcast %6 : vector<1x16xf32> to vector<8x16xf32>
    %36 = vector.broadcast %12 : vector<8x1xf32> to vector<8x16xf32>
    %37 = arith.addf %35, %36 : vector<8x16xf32>
    %38 = arith.addf %37, %7 : vector<8x16xf32>
    %cst_14 = arith.constant dense<0xFF800000> : vector<16xf32>
    %39 = vector.multi_reduction <maximumf>, %38, %cst_14 [0] : vector<8x16xf32> to vector<16xf32>
    %40 = vector.shape_cast %39 : vector<16xf32> to vector<1x16xf32>
    %41 = tpu.iota {dimensions = array<i32: 1>} : vector<1x16xi32>
    %c8_i32 = arith.constant 8 : i32
    %42 = vector.broadcast %c8_i32 : i32 to vector<1x16xi32>
    %43 = arith.cmpi slt, %41, %42 : vector<1x16xi32>
    %44 = arith.select %43, %34, %40 : vector<1x16xi1>, vector<1x16xf32>
    %c0_15 = arith.constant 0 : index
    %c0_16 = arith.constant 0 : index
    %45 = vector.load %arg4[%c0_15, %c0_16] : memref<1x16xf32, #tpu.memory_space<vmem>>, vector<1x16xf32>
    tpu.vector_store %arg4[%c0_15, %c0_16], %44 {strides = array<i32>} : memref<1x16xf32, #tpu.memory_space<vmem>>, vector<1x16xf32>,
    return
  }
}

</mosaic_0001>

<llo_original>
// kernel: bayesian_context_treatment_forward.1
$region0: #{bayesian_context_treatment_forward.1}
  #allocation0 [shape = 'u32[]', space=smem, size = 0x4, offset = 0x4, fixed_abs, tag = 'smem constant byte address 0x4 - core index']
  #allocation1 [shape = 'u32[144,128]{1,0:T(1,128)}', space=vmem, size = 0x12000, scoped, tag = 'internal scratch']
  %s0 = inlined_call_operand.vmem [shape: f32[16,16], index: 0, kind: input, shape index: {}]
  %s1 = inlined_call_operand.vmem [shape: f32[56,17], index: 1, kind: input, shape index: {}]
  %s2 = inlined_call_operand.vmem [shape: f32[8,40], index: 2, kind: input, shape index: {}]
  %s3 = inlined_call_operand.vmem [shape: f32[1,16], index: 3, kind: input, shape index: {}]
  %s4 = inlined_call_operand.vmem [shape: f32[1,16], index: 4, kind: output, shape index: {}]
  %s5 = sld [smem:[#allocation0]]
  $region26: #{bayesian_context_treatment_forward.1} parent=0
    _
  %s7 = ssub.s32 1, %s5
  %s8 = scalar_select 0, %s7, %s5
  // Predicated region
  $region2: #{bayesian_context_treatment_forward.1} parent=0 // pred_check
    _
  $region3: #{bayesian_context_treatment_forward.1} parent=0 // pred_check_branch
    %10 = sbr.rel (0) target = $region5
  $region4: #{bayesian_context_treatment_forward.1} parent=0 // pred_region
    _
  $region5: #{bayesian_context_treatment_forward.1} parent=0 // pred_fallthru
    _
  // Predicated region
  $region6: #{bayesian_context_treatment_forward.1} parent=0 // pred_check
    _
  $region7: #{bayesian_context_treatment_forward.1} parent=0 // pred_check_branch
    %12 = sbr.rel (0) target = $region9
  $region8: #{bayesian_context_treatment_forward.1} parent=0 // pred_region
    _
  $region9: #{bayesian_context_treatment_forward.1} parent=0 // pred_fallthru
    _
  // Predicated region
  $region10: #{bayesian_context_treatment_forward.1} parent=0 // pred_check
    _
  $region11: #{bayesian_context_treatment_forward.1} parent=0 // pred_check_branch
    %14 = sbr.rel (0) target = $region13
  $region12: #{bayesian_context_treatment_forward.1} parent=0 // pred_region
    _
  $region13: #{bayesian_context_treatment_forward.1} parent=0 // pred_fallthru
    _
  // Predicated region
  $region14: #{bayesian_context_treatment_forward.1} parent=0 // pred_check
    _
  $region15: #{bayesian_context_treatment_forward.1} parent=0 // pred_check_branch
    %16 = sbr.rel (0) target = $region17
  $region16: #{bayesian_context_treatment_forward.1} parent=0 // pred_region
    _
  $region17: #{bayesian_context_treatment_forward.1} parent=0 // pred_fallthru
    _
  %v17 = vld [vmem:[%s1] sm:$0xff]
  %v18 = vld [vmem:[%s1 + $0x8] sm:$0xff]
  %v19 = vld [vmem:[%s1 + $0x10] sm:$0xff]
  %v20 = vld [vmem:[%s1 + $0x18] sm:$0xff]
  %v21 = vld [vmem:[%s1 + $0x20] sm:$0xff]
  %v22 = vld [vmem:[%s1 + $0x28] sm:$0xff]
  %v23 = vld [vmem:[%s1 + $0x30] sm:$0xff]
  %v24 = vld [vmem:[%s0] sm:$0xff]
  %v25 = vld [vmem:[%s0 + $0x8] sm:$0xff]
  %27 = vset.pattern.permute.xlu0 16
  %28 = vperm.xlu0 %27, %v17
  %v29 = vpop.permute.xlu0 %28
  %32 = vset.pattern.permute.xlu0 16
  %33 = vperm.xlu0 %32, %v18
  %v34 = vpop.permute.xlu0 %33
  %37 = vset.pattern.permute.xlu0 16
  %38 = vperm.xlu0 %37, %v19
  %v39 = vpop.permute.xlu0 %38
  %42 = vset.pattern.permute.xlu0 16
  %43 = vperm.xlu0 %42, %v20
  %v44 = vpop.permute.xlu0 %43
  %47 = vset.pattern.permute.xlu0 16
  %48 = vperm.xlu0 %47, %v21
  %v49 = vpop.permute.xlu0 %48
  %52 = vset.pattern.permute.xlu0 16
  %53 = vperm.xlu0 %52, %v22
  %v54 = vpop.permute.xlu0 %53
  %57 = vset.pattern.permute.xlu0 16
  %58 = vperm.xlu0 %57, %v23
  %v59 = vpop.permute.xlu0 %58
  %vm61 = vcmask 130048
  %v62 = vsel %vm61, %v17, 0
  %v64 = vsel %vm61, %v18, 0
  %v66 = vsel %vm61, %v19, 0
  %v68 = vsel %vm61, %v20, 0
  %v70 = vsel %vm61, %v21, 0
  %v72 = vsel %vm61, %v22, 0
  %v74 = vsel %vm61, %v23, 0
  %76 = vmatprep.subr.mxu0 0.0
  %77 = vmatpush1.msra.mxu0 0.0
  %78 = vmatprep.subr.mxu0 0.0
  %79 = vmatpush1.msra.mxu0 0.0
  %80 = vmatprep.subr.mxu0 0.0
  %81 = vmatpush1.msra.mxu0 0.0
  %82 = vmatprep.subr.mxu0 0.0
  %83 = vmatpush1.msra.mxu0 0.0
  %84 = vmatprep.subr.mxu0 0.0
  %85 = vmatpush1.msra.mxu0 0.0
  %86 = vmatprep.subr.mxu0 0.0
  %87 = vmatpush1.msra.mxu0 0.0
  %88 = vmatprep.subr.mxu0 0.0
  %89 = vmatpush1.msra.mxu0 0.0
  %90 = vmatprep.subr.mxu0 0.0
  %91 = vmatpush1.msra.mxu0 0.0
  %92 = vmatprep.subr.mxu0 0.0
  %93 = vmatpush1.msra.mxu0 0.0
  %94 = vmatprep.subr.mxu0 0.0
  %95 = vmatpush1.msra.mxu0 0.0
  %96 = vmatprep.subr.mxu0 0.0
  %97 = vmatpush1.msra.mxu0 0.0
  %98 = vmatprep.subr.mxu0 0.0
  %99 = vmatpush1.msra.mxu0 0.0
  %100 = vmatprep.subr.mxu0 0.0
  %101 = vmatpush1.msra.mxu0 0.0
  %102 = vmatprep.subr.mxu0 0.0
  %103 = vmatpush1.msra.mxu0 0.0
  %104 = vmatprep.subr.mxu0 0.0
  %105 = vmatpush1.msra.mxu0 %v25
  %106 = vmatprep.subr.mxu0 0.0
  %107 = vmatpush1.msra.mxu0 %v24
  %108 = vmatprep.subr.mxu0 0.0
  %109 = vmatpush2.msra.mxu0 0.0
  %110 = vmatprep.subr.mxu0 0.0
  %111 = vmatpush2.msra.mxu0 0.0
  %112 = vmatprep.subr.mxu0 0.0
  %113 = vmatpush2.msra.mxu0 0.0
  %114 = vmatprep.subr.mxu0 0.0
  %115 = vmatpush2.msra.mxu0 0.0
  %116 = vmatprep.subr.mxu0 0.0
  %117 = vmatpush2.msra.mxu0 0.0
  %118 = vmatprep.subr.mxu0 0.0
  %119 = vmatpush2.msra.mxu0 0.0
  %120 = vmatprep.subr.mxu0 0.0
  %121 = vmatpush2.msra.mxu0 0.0
  %122 = vmatprep.subr.mxu0 0.0
  %123 = vmatpush2.msra.mxu0 0.0
  %124 = vmatprep.subr.mxu0 0.0
  %125 = vmatpush2.msra.mxu0 0.0
  %126 = vmatprep.subr.mxu0 0.0
  %127 = vmatpush2.msra.mxu0 0.0
  %128 = vmatprep.subr.mxu0 0.0
  %129 = vmatpush2.msra.mxu0 0.0
  %130 = vmatprep.subr.mxu0 0.0
  %131 = vmatpush2.msra.mxu0 0.0
  %132 = vmatprep.subr.mxu0 0.0
  %133 = vmatpush2.msra.mxu0 0.0
  %134 = vmatprep.subr.mxu0 0.0
  %135 = vmatpush2.msra.mxu0 0.0
  %136 = vmatprep.subr.mxu0 0.0
  %137 = vmatpush2.msra.mxu0 0.0
  %138 = vmatprep.subr.mxu0 0.0
  %139 = vmatpush2.msra.mxu0 0.0
  %140 = vmatprep.mubr.f32.mxu0 0.0
  %141 = vmatmul.mubr.f32.gmra.mxu0 %v62
  %v142 = vpop.f32.mrf.mxu0
  %v143 = vadd.f32 %v29, %v142
  %v144 = vpop.f32.mrf.mxu0
  %145 = vmatprep.mubr.f32.mxu0 0.0
  %146 = vmatmul.mubr.f32.gmra.mxu0 %v64
  %v147 = vpop.f32.mrf.mxu0
  %v148 = vadd.f32 %v34, %v147
  %v149 = vpop.f32.mrf.mxu0
  %150 = vmatprep.mubr.f32.mxu0 0.0
  %151 = vmatmul.mubr.f32.gmra.mxu0 %v66
  %v152 = vpop.f32.mrf.mxu0
  %v153 = vadd.f32 %v39, %v152
  %v154 = vpop.f32.mrf.mxu0
  %155 = vmatprep.mubr.f32.mxu0 0.0
  %156 = vmatmul.mubr.f32.gmra.mxu0 %v68
  %v157 = vpop.f32.mrf.mxu0
  %v158 = vadd.f32 %v44, %v157
  %v159 = vpop.f32.mrf.mxu0
  %160 = vmatprep.mubr.f32.mxu0 0.0
  %161 = vmatmul.mubr.f32.gmra.mxu0 %v70
  %v162 = vpop.f32.mrf.mxu0
  %v163 = vadd.f32 %v49, %v162
  %v164 = vpop.f32.mrf.mxu0
  %165 = vmatprep.mubr.f32.mxu0 0.0
  %166 = vmatmul.mubr.f32.gmra.mxu0 %v72
  %v167 = vpop.f32.mrf.mxu0
  %v168 = vadd.f32 %v54, %v167
  %v169 = vpop.f32.mrf.mxu0
  %170 = vmatprep.mubr.f32.mxu0 0.0
  %171 = vmatmul.mubr.f32.gmra.mxu0 %v74
  %v172 = vpop.f32.mrf.mxu0
  %v173 = vadd.f32 %v59, %v172
  %v174 = vpop.f32.mrf.mxu0
  %175 = vdwg.mxu0
  %v176 = vmax.f32 %v153, 0.0
  %v177 = vmax.f32 %v158, 0.0
  %v178 = vmax.f32 %v163, 0.0
  %v179 = vmax.f32 %v168, 0.0
  %v180 = vmax.f32 %v173, 0.0
  %v181 = vld [vmem:[%s2] sm:$0xff]
  %vm182 = vcmask 326656
  %v184 = vsel %vm182, %v181, 0
  %186 = vmatprep.subr.mxu0 0.0
  %187 = vmatpush1.msra.mxu0 0.0
  %188 = vmatprep.subr.mxu0 0.0
  %189 = vmatpush1.msra.mxu0 0.0
  %190 = vmatprep.subr.mxu0 0.0
  %191 = vmatpush1.msra.mxu0 0.0
  %192 = vmatprep.subr.mxu0 0.0
  %193 = vmatpush1.msra.mxu0 0.0
  %194 = vmatprep.subr.mxu0 0.0
  %195 = vmatpush1.msra.mxu0 0.0
  %196 = vmatprep.subr.mxu0 0.0
  %197 = vmatpush1.msra.mxu0 0.0
  %198 = vmatprep.subr.mxu0 0.0
  %199 = vmatpush1.msra.mxu0 0.0
  %200 = vmatprep.subr.mxu0 0.0
  %201 = vmatpush1.msra.mxu0 0.0
  %202 = vmatprep.subr.mxu0 0.0
  %203 = vmatpush1.msra.mxu0 0.0
  %204 = vmatprep.subr.mxu0 0.0
  %205 = vmatpush1.msra.mxu0 0.0
  %206 = vmatprep.subr.mxu0 0.0
  %207 = vmatpush1.msra.mxu0 0.0
  %208 = vmatprep.subr.mxu0 0.0
  %209 = vmatpush1.msra.mxu0 %v180
  %210 = vmatprep.subr.mxu0 0.0
  %211 = vmatpush1.msra.mxu0 %v179
  %212 = vmatprep.subr.mxu0 0.0
  %213 = vmatpush1.msra.mxu0 %v178
  %214 = vmatprep.subr.mxu0 0.0
  %215 = vmatpush1.msra.mxu0 %v177
  %216 = vmatprep.subr.mxu0 0.0
  %217 = vmatpush1.msra.mxu0 %v176
  %218 = vmatprep.subr.mxu0 0.0
  %219 = vmatpush2.msra.mxu0 0.0
  %220 = vmatprep.subr.mxu0 0.0
  %221 = vmatpush2.msra.mxu0 0.0
  %222 = vmatprep.subr.mxu0 0.0
  %223 = vmatpush2.msra.mxu0 0.0
  %224 = vmatprep.subr.mxu0 0.0
  %225 = vmatpush2.msra.mxu0 0.0
  %226 = vmatprep.subr.mxu0 0.0
  %227 = vmatpush2.msra.mxu0 0.0
  %228 = vmatprep.subr.mxu0 0.0
  %229 = vmatpush2.msra.mxu0 0.0
  %230 = vmatprep.subr.mxu0 0.0
  %231 = vmatpush2.msra.mxu0 0.0
  %232 = vmatprep.subr.mxu0 0.0
  %233 = vmatpush2.msra.mxu0 0.0
  %234 = vmatprep.subr.mxu0 0.0
  %235 = vmatpush2.msra.mxu0 0.0
  %236 = vmatprep.subr.mxu0 0.0
  %237 = vmatpush2.msra.mxu0 0.0
  %238 = vmatprep.subr.mxu0 0.0
  %239 = vmatpush2.msra.mxu0 0.0
  %240 = vmatprep.subr.mxu0 0.0
  %241 = vmatpush2.msra.mxu0 0.0
  %242 = vmatprep.subr.mxu0 0.0
  %243 = vmatpush2.msra.mxu0 0.0
  %244 = vmatprep.subr.mxu0 0.0
  %245 = vmatpush2.msra.mxu0 0.0
  %246 = vmatprep.subr.mxu0 0.0
  %247 = vmatpush2.msra.mxu0 0.0
  %248 = vmatprep.subr.mxu0 0.0
  %249 = vmatpush2.msra.mxu0 0.0
  %250 = vmatprep.mubr.f32.mxu0 0.0
  %251 = vmatmul.mubr.f32.gmra.mxu0 %v184
  %v252 = vpop.f32.mrf.mxu0
  %v253 = vadd.f32 0.0, %v252
  %v254 = vpop.f32.mrf.mxu0
  %255 = vdwg.mxu0
  %v256 = vsel %vm61, %v253, -inf
  %v257 = vrot.slane %v256, 4
  %v258 = vmax.f32 %v256, %v257
  %v259 = vrot.slane %v258, 2
  %v260 = vmax.f32 %v258, %v259
  %v261 = vrot.slane %v260, 1
  %v262 = vmax.f32 %v260, %v261
  %v263 = vsub.f32 %v253, %v262
  %v264 = vmul.f32 %v263, 1.442695
  %v265 = vpow.pop %v264
  %v266 = vsel %vm61, %v265, 0.0
  %v267 = vrot.slane %v266, 4
  %v268 = vadd.f32 %v266, %v267
  %v269 = vrot.slane %v268, 2
  %v270 = vadd.f32 %v268, %v269
  %v271 = vrot.slane %v270, 1
  %v272 = vadd.f32 %v270, %v271
  %v273 = vrcp.pop %v272
  %v274 = vmul.f32 %v265, %v273
  %275 = vset.pattern.permute.xlu0 33
  %276 = vperm.xlu0 %275, %v181
  %v277 = vpop.permute.xlu0 %276
  %v279 = vmul.f32 %v274, %v277
  %v280 = vsel %vm61, %v279, 0.0
  %v281 = vrot.slane %v280, 4
  %v282 = vadd.f32 %v280, %v281
  %v283 = vrot.slane %v282, 2
  %v284 = vadd.f32 %v282, %v283
  %v285 = vrot.slane %v284, 1
  %v286 = vadd.f32 %v284, %v285
  %v287 = vmul.f32 %v274, %v148
  %v288 = vsel %vm61, %v287, 0.0
  %v289 = vrot.slane %v288, 4
  %v290 = vadd.f32 %v288, %v289
  %v291 = vrot.slane %v290, 2
  %v292 = vadd.f32 %v290, %v291
  %v293 = vrot.slane %v292, 1
  %v294 = vadd.f32 %v292, %v293
  %v295 = vadd.f32 %v143, %v286
  %v296 = vadd.f32 %v295, %v294
  %v297 = vld [vmem:[%s3] sm:$0x1]
  %v298 = vadd.f32 %v296, %v297
  %v299 = vlaneseq
  %v300 = vshrl.u32 %v299, 7
  %v301 = vsub.s32 0, %v300
  %v302 = vrot.slane %v143, %v301
  %v303 = vadd.f32 %v302, %v277
  %v304 = vadd.f32 %v303, %v148
  %v305 = vsel %vm61, %v304, -inf
  %v306 = vrot.slane %v305, 4
  %v307 = vmax.f32 %v305, %v306
  %v308 = vrot.slane %v307, 2
  %v309 = vmax.f32 %v307, %v308
  %v310 = vrot.slane %v309, 1
  %v311 = vmax.f32 %v309, %v310
  %v312 = vlaneseq
  %v313 = vand.u32 %v312, 127
  %vm314 = vcmp.lt.s32.totalorder %v313, 8
  %v315 = vsel %vm314, %v298, %v311
  %vm316 = vcmask 122880
  %317 = vst.msk [vmem:[%s4] sm:$0x1] %vm316, %v315
  // Predicated region
  $region18: #{bayesian_context_treatment_forward.1} parent=0 // pred_check
    _
  $region19: #{bayesian_context_treatment_forward.1} parent=0 // pred_check_branch
    %319 = sbr.rel (0) target = $region21
  $region20: #{bayesian_context_treatment_forward.1} parent=0 // pred_region
    _
  $region21: #{bayesian_context_treatment_forward.1} parent=0 // pred_fallthru
    _
  // Predicated region
  $region22: #{bayesian_context_treatment_forward.1} parent=0 // pred_check
    _
  $region23: #{bayesian_context_treatment_forward.1} parent=0 // pred_check_branch
    %321 = sbr.rel (0) target = $region25
  $region24: #{bayesian_context_treatment_forward.1} parent=0 // pred_region
    _
  $region25: #{bayesian_context_treatment_forward.1} parent=0 // pred_fallthru
    _

</llo_original>
